<compile_context>
chip_gen: v6e
topology: v6e:2x2x1
jax: 0.10.0
libtpu: 0.0.40
codegen_flags: <defaults>
</compile_context>

<pallas_src>
import functools

import jax
import jax.numpy as jnp
from jax.experimental import pallas as pl
from jax.experimental.pallas import tpu as pltpu

_MIB = 1 << 20


# --------------------------------------------------------------------------
# Generation detection (best effort; conservative fallbacks).
# --------------------------------------------------------------------------
def _tpu_generation_info():
    """Returns (physical_vmem_bytes, is_v7x_like)."""
    info_vmem = None
    try:
        info_vmem = int(pltpu.get_tpu_info().vmem_capacity_bytes)
    except Exception:
        info_vmem = None
    kind = ""
    try:
        kind = jax.devices()[0].device_kind.lower()
    except Exception:
        pass
    is_v7x = ("v7" in kind) or (info_vmem is not None and info_vmem <= 64 * _MIB)
    if info_vmem is not None:
        phys_vmem = info_vmem
    elif is_v7x or not kind:
        phys_vmem = 64 * _MIB      # unknown chip: be conservative
    else:
        phys_vmem = 128 * _MIB     # v5e / v6e
    return phys_vmem, is_v7x


def _vmem_footprint(block_b, in_size, dim_k, x_itemsize, out_itemsize, w_itemsize):
    """VMEM bytes for one grid step: tiles + resident weights + intermediates."""
    x_tile = block_b * in_size * x_itemsize
    o_tile = block_b * dim_k * out_itemsize
    w_bytes = (in_size * dim_k + dim_k * dim_k) * w_itemsize   # single-buffered
    bias_bytes = 2 * dim_k * 4                                 # single-buffered
    # in-kernel intermediates: compute-dtype copy of x, f32 h, compute-dtype h
    interm = (block_b * in_size * w_itemsize
              + block_b * dim_k * (4 + w_itemsize))
    return 2 * (x_tile + o_tile) + w_bytes + bias_bytes + interm


# --------------------------------------------------------------------------
# Kernel
# --------------------------------------------------------------------------
def _shared_network_kernel(x_ref, w1_ref, b1_ref, w2_ref, b2_ref, o_ref, *,
                           compute_dtype):
    # Hoist bias loads/broadcasts once per grid step (JAX does not CSE
    # broadcast_in_dim).
    b1 = b1_ref[...].astype(jnp.float32)          # (1, dim_k)
    b2 = b2_ref[...].astype(jnp.float32)          # (1, dim_k)

    # MXU matmul #1: compute-dtype inputs, f32 accumulation.
    x = x_ref[...].astype(compute_dtype)
    h = jnp.dot(x, w1_ref[...], preferred_element_type=jnp.float32)
    h = jnp.maximum(h + b1, 0.0)                  # bias + ReLU in f32 (VPU)

    # MXU matmul #2.
    # NOTE: h is rounded to compute_dtype (bf16) here; for exact f32 parity
    # with the PyTorch module, prepare_params(use_bf16=False) keeps everything
    # in f32 (kernel is HBM-bound, so the reduced-rate f32 MXU path is free).
    o = jnp.dot(h.astype(compute_dtype), w2_ref[...],
                preferred_element_type=jnp.float32)
    o_ref[...] = (o + b2).astype(o_ref.dtype)


# --------------------------------------------------------------------------
# Params: convert ONCE outside the hot path (halves weight DMA per call).
# --------------------------------------------------------------------------
def prepare_params(w1, b1, w2, b2, *, use_bf16=True):
    compute_dtype = jnp.bfloat16 if use_bf16 else jnp.float32
    dim_k = w1.shape[1]
    return (w1.astype(compute_dtype),
            b1.reshape(1, dim_k).astype(jnp.float32),
            w2.astype(compute_dtype),
            b2.reshape(1, dim_k).astype(jnp.float32))


# --------------------------------------------------------------------------
# Forward
# --------------------------------------------------------------------------
def shared_network_apply(state, params, *, block_b=None, out_dtype=None):
    """Pallas forward pass of SharedNetwork.feature_emb.

    state:  (B, input_size)
    params: output of prepare_params(w1, b1, w2, b2)
    returns (B, dim_k) in out_dtype (default: state.dtype)
    """
    w1_c, b1_2d, w2_c, b2_2d = params
    B, in_size = state.shape
    dim_k = w1_c.shape[1]
    compute_dtype = w1_c.dtype
    out_dtype = state.dtype if out_dtype is None else out_dtype

    phys_vmem, is_v7x = _tpu_generation_info()
    if phys_vmem <= 64 * _MIB:
        vmem_cap = phys_vmem - 8 * _MIB           # v7x: ~56 MiB usable
    else:
        vmem_cap = 104 * _MIB                     # v5e/v6e: leave headroom of 128

    x_itemsize = jnp.dtype(state.dtype).itemsize
    o_itemsize = jnp.dtype(out_dtype).itemsize
    w_itemsize = jnp.dtype(compute_dtype).itemsize
    footprint = functools.partial(_vmem_footprint, in_size=in_size, dim_k=dim_k,
                                  x_itemsize=x_itemsize, out_itemsize=o_itemsize,
                                  w_itemsize=w_itemsize)

    # ---- batch-tile selection -------------------------------------------
    b8 = ((B + 7) // 8) * 8                       # f32 sublane multiple
    if block_b is None:
        block_b = min(1024, b8)                   # mem-bound: biggest tile that fits
        while block_b > 8 and footprint(block_b) > vmem_cap:
            block_b = max(8, ((block_b // 2 + 7) // 8) * 8)
        # Megacore split: v7x only, and only if each half still fills MXU M.
        if is_v7x and pl.cdiv(B, block_b) < 2:
            half = ((b8 // 2 + 7) // 8) * 8
            if half >= 128:
                block_b = half
    grid = (pl.cdiv(B, block_b),)

    # ---- VMEM budget: ALWAYS pass an explicit limit (v5e default is 16 MiB)
    vmem_est = footprint(block_b)
    vmem_limit = int(min(max(int(vmem_est * 1.25) + 2 * _MIB, 16 * _MIB), vmem_cap))
    # TODO(synk): if resident weights + tiles exceed ~48 MiB on v7x (dim_k
    # around 2-3k in bf16), add a K/N-tiling "arbitrary" grid axis for W2 with
    # an f32 VMEM accumulator instead of keeping W2 fully resident.

    # ---- cost hint for the XLA scheduler ----------------------------------
    flops = 2 * B * (in_size * dim_k + dim_k * dim_k)
    w_bytes = (in_size * dim_k + dim_k * dim_k) * w_itemsize
    bytes_accessed = (B * in_size * x_itemsize + w_bytes + 2 * dim_k * 4
                      + B * dim_k * o_itemsize)
    cost = pl.CostEstimate(flops=flops, transcendentals=0,
                           bytes_accessed=bytes_accessed)

    kernel = functools.partial(_shared_network_kernel,
                               compute_dtype=compute_dtype)

    # Constant-index blocks (weights, biases): single-buffer unconditionally.
    resident = {"pipeline_mode": pl.Buffered(1)}

    return pl.pallas_call(
        kernel,
        out_shape=jax.ShapeDtypeStruct((B, dim_k), out_dtype),
        grid_spec=pltpu.PrefetchScalarGridSpec(
            num_scalar_prefetch=0,
            grid=grid,
            in_specs=[
                pl.BlockSpec((block_b, in_size), lambda i: (i, 0)),        # x tile
                pl.BlockSpec((in_size, dim_k), lambda i: (0, 0), **resident),  # W1
                pl.BlockSpec((1, dim_k), lambda i: (0, 0), **resident),        # b1
                pl.BlockSpec((dim_k, dim_k), lambda i: (0, 0), **resident),    # W2
                pl.BlockSpec((1, dim_k), lambda i: (0, 0), **resident),        # b2
            ],
            out_specs=pl.BlockSpec((block_b, dim_k), lambda i: (i, 0)),    # lane-dense
        ),
        compiler_params=pltpu.CompilerParams(
            dimension_semantics=("parallel",),
            vmem_limit_bytes=vmem_limit,
        ),
        cost_estimate=cost,
    )(state, w1_c, b1_2d, w2_c, b2_2d)


def shared_network_forward(state, w1, b1, w2, b2, *, block_b=None, use_bf16=True):
    """Convenience wrapper matching the old signature (casts weights per call;
    prefer prepare_params + shared_network_apply in a hot loop)."""
    params = prepare_params(w1, b1, w2, b2, use_bf16=use_bf16)
    return shared_network_apply(state, params, block_b=block_b)


def init_params(key, input_size, dim_k, dtype=jnp.float32):
    """Deterministic init mirroring nn.Linear default (U[-1/sqrt(fan_in), 1/sqrt(fan_in)])."""
    k1, k2, k3, k4 = jax.random.split(key, 4)
    bound1 = 1.0 / jnp.sqrt(jnp.float32(input_size))
    bound2 = 1.0 / jnp.sqrt(jnp.float32(dim_k))
    w1 = jax.random.uniform(k1, (input_size, dim_k), dtype, -bound1, bound1)
    b1 = jax.random.uniform(k2, (dim_k,), dtype, -bound1, bound1)
    w2 = jax.random.uniform(k3, (dim_k, dim_k), dtype, -bound2, bound2)
    b2 = jax.random.uniform(k4, (dim_k,), dtype, -bound2, bound2)
    return w1, b1, w2, b2


if __name__ == "__main__":
    key = jax.random.PRNGKey(0)
    batch = 8
    input_size = 32
    dim_k = 128

    k_x, k_p = jax.random.split(key)
    state = jax.random.normal(k_x, (batch, input_size), jnp.float32)
    w1, b1, w2, b2 = init_params(k_p, input_size, dim_k)

    # Cast weights ONCE, outside the forward path.
    params = prepare_params(w1, b1, w2, b2, use_bf16=True)

    out = shared_network_apply(state, params)
    out = jax.block_until_ready(out)
    assert out.shape == (batch, dim_k)
    assert out.dtype == state.dtype

    # Precision-matched reference (bf16 MXU inputs, f32 accumulation).
    xb = state.astype(jnp.bfloat16)
    w1b = w1.astype(jnp.bfloat16)
    w2b = w2.astype(jnp.bfloat16)
    h_ref = jnp.maximum(
        jnp.dot(xb, w1b, preferred_element_type=jnp.float32) + b1, 0.0)
    ref_bf16 = jnp.dot(h_ref.astype(jnp.bfloat16), w2b,
                       preferred_element_type=jnp.float32) + b2
    assert jnp.allclose(out, ref_bf16, atol=1e-4, rtol=1e-4)

    # Loose check against the full-f32 reference (bf16 rounding tolerance).
    ref_f32 = jnp.maximum(state @ w1 + b1, 0.0) @ w2 + b2
    assert jnp.allclose(out, ref_f32, atol=5e-2, rtol=5e-2)

    # f32 path (exact-parity option) also works through the same kernel.
    params_f32 = prepare_params(w1, b1, w2, b2, use_bf16=False)
    out_f32 = jax.block_until_ready(shared_network_apply(state, params_f32))
    assert jnp.allclose(out_f32, ref_f32, atol=1e-5, rtol=1e-5)

    print("KERNEL_OK")
</pallas_src>

<mosaic_0001>
module attributes {stable_mosaic.version = 11 : i64} {
  func.func @_shared_network_kernel(%arg0: i32, %arg1: memref<8x32xf32, #tpu.memory_space<vmem>>, %arg2: memref<32x128xbf16, #tpu.memory_space<vmem>>, %arg3: memref<1x128xf32, #tpu.memory_space<vmem>>, %arg4: memref<128x128xbf16, #tpu.memory_space<vmem>>, %arg5: memref<1x128xf32, #tpu.memory_space<vmem>>, %arg6: memref<8x128xf32, #tpu.memory_space<vmem>>) attributes {dimension_semantics = [#tpu.dimension_semantics<parallel>], iteration_bounds = array<i64: 1>, scalar_prefetch = 0 : i64, scratch_operands = 0 : i64, tpu.core_type = #tpu.core_type<tc>, window_params = [{transform_indices = @transform_0, window_bounds = array<i64: 8, 32>}, {pipeline_mode = #tpu.pipeline_mode<synchronous>, transform_indices = @transform_1, window_bounds = array<i64: 32, 128>}, {pipeline_mode = #tpu.pipeline_mode<synchronous>, transform_indices = @transform_2, window_bounds = array<i64: 1, 128>}, {pipeline_mode = #tpu.pipeline_mode<synchronous>, transform_indices = @transform_3, window_bounds = array<i64: 128, 128>}, {pipeline_mode = #tpu.pipeline_mode<synchronous>, transform_indices = @transform_4, window_bounds = array<i64: 1, 128>}, {transform_indices = @transform_5, window_bounds = array<i64: 8, 128>}]} {
    %c0 = arith.constant 0 : index
    %c0_0 = arith.constant 0 : index
    %0 = vector.load %arg3[%c0, %c0_0] : memref<1x128xf32, #tpu.memory_space<vmem>>, vector<1x128xf32>
    %c0_1 = arith.constant 0 : index
    %c0_2 = arith.constant 0 : index
    %1 = vector.load %arg5[%c0_1, %c0_2] : memref<1x128xf32, #tpu.memory_space<vmem>>, vector<1x128xf32>
    %c0_3 = arith.constant 0 : index
    %c0_4 = arith.constant 0 : index
    %2 = vector.load %arg1[%c0_3, %c0_4] : memref<8x32xf32, #tpu.memory_space<vmem>>, vector<8x32xf32>
    %3 = arith.truncf %2 : vector<8x32xf32> to vector<8x32xbf16>
    %c0_5 = arith.constant 0 : index
    %c0_6 = arith.constant 0 : index
    %4 = vector.load %arg2[%c0_5, %c0_6] : memref<32x128xbf16, #tpu.memory_space<vmem>>, vector<32x128xbf16>
    %cst = arith.constant dense<0.000000e+00> : vector<8x128xf32>
    %5 = tpu.matmul %3, %4, %cst {dimension_numbers = #tpu.dot_dimension_numbers<[1], [0], [0], [1], [0, 0, 1, 1], [], []>} : vector<8x32xbf16>, vector<32x128xbf16>, vector<8x128xf32> -> vector<8x128xf32>
    %6 = vector.broadcast %0 : vector<1x128xf32> to vector<8x128xf32>
    %7 = arith.addf %5, %6 : vector<8x128xf32>
    %cst_7 = arith.constant 0.000000e+00 : f32
    %8 = vector.broadcast %cst_7 : f32 to vector<8x128xf32>
    %9 = arith.maximumf %7, %8 : vector<8x128xf32>
    %10 = arith.truncf %9 : vector<8x128xf32> to vector<8x128xbf16>
    %c0_8 = arith.constant 0 : index
    %c0_9 = arith.constant 0 : index
    %11 = vector.load %arg4[%c0_8, %c0_9] : memref<128x128xbf16, #tpu.memory_space<vmem>>, vector<128x128xbf16>
    %cst_10 = arith.constant dense<0.000000e+00> : vector<8x128xf32>
    %12 = tpu.matmul %10, %11, %cst_10 {dimension_numbers = #tpu.dot_dimension_numbers<[1], [0], [0], [1], [0, 0, 1, 1], [], []>} : vector<8x128xbf16>, vector<128x128xbf16>, vector<8x128xf32> -> vector<8x128xf32>
    %13 = vector.broadcast %1 : vector<1x128xf32> to vector<8x128xf32>
    %14 = arith.addf %12, %13 : vector<8x128xf32>
    %c0_11 = arith.constant 0 : index
    %c0_12 = arith.constant 0 : index
    %15 = vector.load %arg6[%c0_11, %c0_12] : memref<8x128xf32, #tpu.memory_space<vmem>>, vector<8x128xf32>
    tpu.vector_store %arg6[%c0_11, %c0_12], %14 {strides = array<i32>} : memref<8x128xf32, #tpu.memory_space<vmem>>, vector<8x128xf32>,
    return
  }
  func.func @transform_0(%arg0: i32) -> (i32, i32) {
    %c0_i32 = arith.constant 0 : i32
    %c0_i32_0 = arith.constant 0 : i32
    return %arg0, %c0_i32 : i32, i32
  }
  func.func @transform_1(%arg0: i32) -> (i32, i32) {
    %c0_i32 = arith.constant 0 : i32
    %c0_i32_0 = arith.constant 0 : i32
    %c0_i32_1 = arith.constant 0 : i32
    return %c0_i32, %c0_i32_0 : i32, i32
  }
  func.func @transform_2(%arg0: i32) -> (i32, i32) {
    %c0_i32 = arith.constant 0 : i32
    %c0_i32_0 = arith.constant 0 : i32
    %c0_i32_1 = arith.constant 0 : i32
    return %c0_i32, %c0_i32_0 : i32, i32
  }
  func.func @transform_3(%arg0: i32) -> (i32, i32) {
    %c0_i32 = arith.constant 0 : i32
    %c0_i32_0 = arith.constant 0 : i32
    %c0_i32_1 = arith.constant 0 : i32
    return %c0_i32, %c0_i32_0 : i32, i32
  }
  func.func @transform_4(%arg0: i32) -> (i32, i32) {
    %c0_i32 = arith.constant 0 : i32
    %c0_i32_0 = arith.constant 0 : i32
    %c0_i32_1 = arith.constant 0 : i32
    return %c0_i32, %c0_i32_0 : i32, i32
  }
  func.func @transform_5(%arg0: i32) -> (i32, i32) {
    %c0_i32 = arith.constant 0 : i32
    %c0_i32_0 = arith.constant 0 : i32
    return %arg0, %c0_i32 : i32, i32
  }
}

</mosaic_0001>

<llo_original>
// kernel: tpu_custom_call.1
$region0: #{tpu_custom_call.1}
  #allocation0 [shape = 'u32[]', space=smem, size = 0x4, offset = 0x4, fixed_abs, tag = 'smem constant byte address 0x4 - core index']
  #allocation1 [shape = 'u32[144,128]{1,0:T(1,128)}', space=vmem, size = 0x12000, scoped, tag = 'internal scratch']
  %s0 = inlined_call_operand.hbm [shape: f32[8,32], index: 0, kind: input, shape index: {}]
  %s1 = inlined_call_operand.hbm [shape: bf16[32,128], index: 1, kind: input, shape index: {}]
  %s2 = inlined_call_operand.vmem [shape: f32[1,128], index: 2, kind: input, shape index: {}]
  %s3 = inlined_call_operand.hbm [shape: bf16[128,128], index: 3, kind: input, shape index: {}]
  %s4 = inlined_call_operand.vmem [shape: f32[1,128], index: 4, kind: input, shape index: {}]
  %s5 = inlined_call_operand.hbm [shape: f32[8,128], index: 5, kind: output, shape index: {}]
  %s6 = sld [smem:[#allocation0]]
  $region42: #{tpu_custom_call.1} parent=0
    _
  %s8 = ssub.s32 1, %s6
  %s9 = scalar_select 0, %s8, %s6
  $region1: #{tpu_custom_call.1} parent=0
    #allocation2 [shape = 'u8[4096]{0}', space=vmem, size = 0x1000, scoped, tag = 'input window, operand 0, single buffered']
    #allocation3 [shape = 's32[1]{0}', space=sflag, size = 0x4, scoped, tag = 'scoped memory for tpu_custom_call.1']
    #allocation4 [shape = 's32[1]{0}', space=sflag, size = 0x4, scoped, tag = 'scoped memory for tpu_custom_call.1']
    #allocation5 [shape = 'u8[8192]{0}', space=vmem, size = 0x2000, scoped, tag = 'input window, operand 1, single buffered']
    #allocation6 [shape = 's32[1]{0}', space=sflag, size = 0x4, scoped, tag = 'scoped memory for tpu_custom_call.1']
    #allocation7 [shape = 'u8[32768]{0}', space=vmem, size = 0x8000, scoped, tag = 'input window, operand 3, single buffered']
    #allocation8 [shape = 'u8[4096]{0}', space=vmem, size = 0x1000, scoped, tag = 'output window, operand 0, single buffered']
    %10 = vsyncpa [#allocation3], 0
    %11 = vsyncpa [#allocation6], 0
    %12 = vsyncpa [#allocation4], 0
    // Predicated region
    $region2: #{tpu_custom_call.1} parent=1 // pred_check
      _
    $region3: #{tpu_custom_call.1} parent=1 // pred_check_branch
      %14 = sbr.rel (0) target = $region5
    $region4: #{tpu_custom_call.1} parent=1 // pred_region
      %s16 = ssub.s32 128, 128
      %17 = vsyncadd [#allocation3], %s16
      %s19 = sshll.u32 [#allocation2], 4
      %s20 = int_to_ptr.vmem [resolvable:$true] %s19
      %22 = dma.hbm_to_vmem [thread:$0]  %s0, 128, %s20, [#allocation3]
    $region5: #{tpu_custom_call.1} parent=1 // pred_fallthru
      _
    // Predicated region
    $region6: #{tpu_custom_call.1} parent=1 // pred_check
      _
    $region7: #{tpu_custom_call.1} parent=1 // pred_check_branch
      %24 = sbr.rel (0) target = $region9
    $region8: #{tpu_custom_call.1} parent=1 // pred_region
      %s26 = ssub.s32 256, 256
      %27 = vsyncadd [#allocation6], %s26
      %s28 = sshll.u32 [#allocation5], 4
      %s29 = int_to_ptr.vmem [resolvable:$true] %s28
      %34 = dma.hbm_to_vmem [thread:$0]  %s1, 256, %s29, [#allocation6], 64, 64, 4
    $region9: #{tpu_custom_call.1} parent=1 // pred_fallthru
      _
    // Predicated region
    $region10: #{tpu_custom_call.1} parent=1 // pred_check
      _
    $region11: #{tpu_custom_call.1} parent=1 // pred_check_branch
      %36 = sbr.rel (0) target = $region13
    $region12: #{tpu_custom_call.1} parent=1 // pred_region
      _
    $region13: #{tpu_custom_call.1} parent=1 // pred_fallthru
      _
    // Predicated region
    $region14: #{tpu_custom_call.1} parent=1 // pred_check
      _
    $region15: #{tpu_custom_call.1} parent=1 // pred_check_branch
      %38 = sbr.rel (0) target = $region17
    $region16: #{tpu_custom_call.1} parent=1 // pred_region
      %s40 = ssub.s32 1024, 1024
      %41 = vsyncadd [#allocation6], %s40
      %s42 = sshll.u32 [#allocation7], 4
      %s43 = int_to_ptr.vmem [resolvable:$true] %s42
      %48 = dma.hbm_to_vmem [thread:$0]  %s3, 1024, %s43, [#allocation6], 64, 64, 4
    $region17: #{tpu_custom_call.1} parent=1 // pred_fallthru
      _
    // Predicated region
    $region18: #{tpu_custom_call.1} parent=1 // pred_check
      _
    $region19: #{tpu_custom_call.1} parent=1 // pred_check_branch
      %50 = sbr.rel (0) target = $region21
    $region20: #{tpu_custom_call.1} parent=1 // pred_region
      _
    $region21: #{tpu_custom_call.1} parent=1 // pred_fallthru
      _
    // Predicated region
    $region22: #{tpu_custom_call.1} parent=1 // pred_check
      _
    $region23: #{tpu_custom_call.1} parent=1 // pred_check_branch
      %52 = sbr.rel (0) target = $region25
    $region24: #{tpu_custom_call.1} parent=1 // pred_region
      %53 = dma.done [#allocation3], 128
    $region25: #{tpu_custom_call.1} parent=1 // pred_fallthru
      _
    // Predicated region
    $region26: #{tpu_custom_call.1} parent=1 // pred_check
      _
    $region27: #{tpu_custom_call.1} parent=1 // pred_check_branch
      %55 = sbr.rel (0) target = $region29
    $region28: #{tpu_custom_call.1} parent=1 // pred_region
      %56 = dma.done [#allocation6], 256
    $region29: #{tpu_custom_call.1} parent=1 // pred_fallthru
      _
    // Predicated region
    $region30: #{tpu_custom_call.1} parent=1 // pred_check
      _
    $region31: #{tpu_custom_call.1} parent=1 // pred_check_branch
      %58 = sbr.rel (0) target = $region33
    $region32: #{tpu_custom_call.1} parent=1 // pred_region
      %59 = dma.done [#allocation6], 1024
    $region33: #{tpu_custom_call.1} parent=1 // pred_fallthru
      _
    %v61 = vld [vmem:[%s2] sm:$0x1]
    %v62 = vld [vmem:[%s4] sm:$0x1]
    %v63 = vld [vmem:[#allocation2] sm:$0xff]
    %v64 = vpack.c.bf16 %v63, %v63
    %v65 = vld [vmem:[#allocation5] sm:$0xf]
    %v66 = vld [vmem:[#allocation5 + $0x4] sm:$0xf]
    %v67 = vld [vmem:[#allocation5 + $0x8] sm:$0xf]
    %v68 = vld [vmem:[#allocation5 + $0xc] sm:$0xf]
    %v70 = vlaneseq
    %v71 = vshrl.u32 %v70, 7
    %v72 = vsub.s32 0, %v71
    %v73 = vrot.slane %v61, %v72
    %v79 = vunpack.c.l.b16 %v65
    %v80 = vunpack.c.l.b16 %v66
    %v81 = vunpack.c.l.b16 %v67
    %v82 = vunpack.c.l.b16 %v68
    %v83 = vpack.c.b16 %v80, %v79
    %v84 = vpack.c.b16 %v82, %v81
    %vm87 = vcmask 261120
    %v89 = vsel %vm87, %v64, 0
    %91 = vmatprep.subr.bf16.mxu0 0
    %92 = vmatpush1.bf16.msra.mxu0 0
    %93 = vmatprep.subr.bf16.mxu0 0
    %94 = vmatpush1.bf16.msra.mxu0 0
    %95 = vmatprep.subr.bf16.mxu0 0
    %96 = vmatpush1.bf16.msra.mxu0 0
    %97 = vmatprep.subr.bf16.mxu0 0
    %98 = vmatpush1.bf16.msra.mxu0 0
    %99 = vmatprep.subr.bf16.mxu0 0
    %100 = vmatpush1.bf16.msra.mxu0 0
    %101 = vmatprep.subr.bf16.mxu0 0
    %102 = vmatpush1.bf16.msra.mxu0 0
    %103 = vmatprep.subr.bf16.mxu0 0
    %104 = vmatpush1.bf16.msra.mxu0 %v84
    %105 = vmatprep.subr.bf16.mxu0 0
    %106 = vmatpush1.bf16.msra.mxu0 %v83
    %107 = vmatprep.subr.bf16.mxu0 0
    %108 = vmatpush2.bf16.msra.mxu0 0
    %109 = vmatprep.subr.bf16.mxu0 0
    %110 = vmatpush2.bf16.msra.mxu0 0
    %111 = vmatprep.subr.bf16.mxu0 0
    %112 = vmatpush2.bf16.msra.mxu0 0
    %113 = vmatprep.subr.bf16.mxu0 0
    %114 = vmatpush2.bf16.msra.mxu0 0
    %115 = vmatprep.subr.bf16.mxu0 0
    %116 = vmatpush2.bf16.msra.mxu0 0
    %117 = vmatprep.subr.bf16.mxu0 0
    %118 = vmatpush2.bf16.msra.mxu0 0
    %119 = vmatprep.subr.bf16.mxu0 0
    %120 = vmatpush2.bf16.msra.mxu0 0
    %121 = vmatprep.subr.bf16.mxu0 0
    %122 = vmatpush2.bf16.msra.mxu0 0
    %123 = vmatprep.mubr.bf16.mxu0 0
    %124 = vmatmul.mubr.bf16.gmra.mxu0 %v89
    %v125 = vpop.f32.mrf.mxu0
    %v126 = vadd.f32 %v73, %v125
    %v127 = vpop.f32.mrf.mxu0
    %v128 = vpop.f32.mrf.mxu0
    %v129 = vpop.f32.mrf.mxu0
    %130 = vdwg.mxu0
    %v131 = vmax.f32 %v126, 0.0
    %v132 = vpack.c.bf16 %v131, %v131
    %v133 = vld [vmem:[#allocation7] sm:$0xf]
    %v134 = vld [vmem:[#allocation7 + $0x4] sm:$0xf]
    %v135 = vld [vmem:[#allocation7 + $0x8] sm:$0xf]
    %v136 = vld [vmem:[#allocation7 + $0xc] sm:$0xf]
    %v137 = vld [vmem:[#allocation7 + $0x10] sm:$0xf]
    %v138 = vld [vmem:[#allocation7 + $0x14] sm:$0xf]
    %v139 = vld [vmem:[#allocation7 + $0x18] sm:$0xf]
    %v140 = vld [vmem:[#allocation7 + $0x1c] sm:$0xf]
    %v141 = vld [vmem:[#allocation7 + $0x20] sm:$0xf]
    %v142 = vld [vmem:[#allocation7 + $0x24] sm:$0xf]
    %v143 = vld [vmem:[#allocation7 + $0x28] sm:$0xf]
    %v144 = vld [vmem:[#allocation7 + $0x2c] sm:$0xf]
    %v145 = vld [vmem:[#allocation7 + $0x30] sm:$0xf]
    %v146 = vld [vmem:[#allocation7 + $0x34] sm:$0xf]
    %v147 = vld [vmem:[#allocation7 + $0x38] sm:$0xf]
    %v148 = vld [vmem:[#allocation7 + $0x3c] sm:$0xf]
    %v150 = vlaneseq
    %v151 = vshrl.u32 %v150, 7
    %v152 = vsub.s32 0, %v151
    %v153 = vrot.slane %v62, %v152
    %v171 = vunpack.c.l.b16 %v133
    %v172 = vunpack.c.l.b16 %v134
    %v173 = vunpack.c.l.b16 %v135
    %v174 = vunpack.c.l.b16 %v136
    %v175 = vunpack.c.l.b16 %v137
    %v176 = vunpack.c.l.b16 %v138
    %v177 = vunpack.c.l.b16 %v139
    %v178 = vunpack.c.l.b16 %v140
    %v179 = vunpack.c.l.b16 %v141
    %v180 = vunpack.c.l.b16 %v142
    %v181 = vunpack.c.l.b16 %v143
    %v182 = vunpack.c.l.b16 %v144
    %v183 = vunpack.c.l.b16 %v145
    %v184 = vunpack.c.l.b16 %v146
    %v185 = vunpack.c.l.b16 %v147
    %v186 = vunpack.c.l.b16 %v148
    %v187 = vpack.c.b16 %v172, %v171
    %v188 = vpack.c.b16 %v174, %v173
    %v189 = vpack.c.b16 %v176, %v175
    %v190 = vpack.c.b16 %v178, %v177
    %v191 = vpack.c.b16 %v180, %v179
    %v192 = vpack.c.b16 %v182, %v181
    %v193 = vpack.c.b16 %v184, %v183
    %v194 = vpack.c.b16 %v186, %v185
    %203 = vmatprep.subr.bf16.mxu0 0
    %204 = vmatpush1.bf16.msra.mxu0 %v194
    %205 = vmatprep.subr.bf16.mxu0 0
    %206 = vmatpush1.bf16.msra.mxu0 %v193
    %207 = vmatprep.subr.bf16.mxu0 0
    %208 = vmatpush1.bf16.msra.mxu0 %v192
    %209 = vmatprep.subr.bf16.mxu0 0
    %210 = vmatpush1.bf16.msra.mxu0 %v191
    %211 = vmatprep.subr.bf16.mxu0 0
    %212 = vmatpush1.bf16.msra.mxu0 %v190
    %213 = vmatprep.subr.bf16.mxu0 0
    %214 = vmatpush1.bf16.msra.mxu0 %v189
    %215 = vmatprep.subr.bf16.mxu0 0
    %216 = vmatpush1.bf16.msra.mxu0 %v188
    %217 = vmatprep.subr.bf16.mxu0 0
    %218 = vmatpush1.bf16.msra.mxu0 %v187
    %219 = vmatprep.subr.bf16.mxu0 0
    %220 = vmatpush2.bf16.msra.mxu0 0
    %221 = vmatprep.subr.bf16.mxu0 0
    %222 = vmatpush2.bf16.msra.mxu0 0
    %223 = vmatprep.subr.bf16.mxu0 0
    %224 = vmatpush2.bf16.msra.mxu0 0
    %225 = vmatprep.subr.bf16.mxu0 0
    %226 = vmatpush2.bf16.msra.mxu0 0
    %227 = vmatprep.subr.bf16.mxu0 0
    %228 = vmatpush2.bf16.msra.mxu0 0
    %229 = vmatprep.subr.bf16.mxu0 0
    %230 = vmatpush2.bf16.msra.mxu0 0
    %231 = vmatprep.subr.bf16.mxu0 0
    %232 = vmatpush2.bf16.msra.mxu0 0
    %233 = vmatprep.subr.bf16.mxu0 0
    %234 = vmatpush2.bf16.msra.mxu0 0
    %235 = vmatprep.mubr.bf16.mxu0 0
    %236 = vmatmul.mubr.bf16.gmra.mxu0 %v132
    %v237 = vpop.f32.mrf.mxu0
    %v238 = vadd.f32 %v153, %v237
    %v239 = vpop.f32.mrf.mxu0
    %v240 = vpop.f32.mrf.mxu0
    %v241 = vpop.f32.mrf.mxu0
    %242 = vdwg.mxu0
    %243 = vst [vmem:[#allocation8] sm:$0xff] %v238
    // Predicated region
    $region34: #{tpu_custom_call.1} parent=1 // pred_check
      _
    $region35: #{tpu_custom_call.1} parent=1 // pred_check_branch
      %245 = sbr.rel (0) target = $region37
    $region36: #{tpu_custom_call.1} parent=1 // pred_region
      %s247 = ssub.s32 128, 128
      %248 = vsyncadd [#allocation4], %s247
      %s250 = sshll.u32 [#allocation8], 4
      %s251 = int_to_ptr.vmem [resolvable:$true] %s250
      %253 = dma.vmem_to_hbm [thread:$0]  %s251, 128, %s5, [#allocation4]
    $region37: #{tpu_custom_call.1} parent=1 // pred_fallthru
      _
    // Predicated region
    $region38: #{tpu_custom_call.1} parent=1 // pred_check
      _
    $region39: #{tpu_custom_call.1} parent=1 // pred_check_branch
      %255 = sbr.rel (0) target = $region41
    $region40: #{tpu_custom_call.1} parent=1 // pred_region
      %256 = dma.done [#allocation4], 128
    $region41: #{tpu_custom_call.1} parent=1 // pred_fallthru
      _
    %257 = vsyncpa [#allocation3], 1
    %258 = vsyncpa [#allocation6], 1
    %259 = vsyncpa [#allocation4], 1

</llo_original>
